<compile_context>
chip_gen: v7x
topology: tpu7x:2x2x1
jax: 0.10.0
libtpu: 0.0.40
codegen_flags: <defaults>
</compile_context>

<pallas_src>
import functools
import math

import numpy as np
import jax
import jax.numpy as jnp
from jax.experimental import pallas as pl
from jax.experimental.pallas import tpu as pltpu

# Clamp constants with exact float32 semantics of torch's pt.clamp(1e-4, 0.9999).
_PT_LO = np.float32(1e-4)
_PT_HI = np.float32(0.9999)
_LOG_PT_LO = float(np.log(_PT_LO))
_LOG_PT_HI = float(np.log(_PT_HI))
_LOG_1M_LO = float(np.log(np.float32(1.0) - _PT_HI))
_LOG_1M_HI = float(np.log(np.float32(1.0) - _PT_LO))


def _focal_loss_kernel(x_ref, t_ref, out_ref, *, gamma, alpha,
                       tile_r, lanes, total_elems, needs_mask):
    i = pl.program_id(0)

    # Widen in-kernel (hidden under DMA); no wrapper-side upcast.
    x = x_ref[...].astype(jnp.float32)            # (tile_r, lanes)
    t = t_ref[...].astype(jnp.float32)            # (tile_r, lanes)

    # --- sigmoid + both logs from a single exp / single log (EUP-lean) ------
    e = jnp.exp(-jnp.abs(x))                      # exp(-|x|) in (0, 1]
    s = 1.0 + e                                   # in (1, 2]
    log_s = jnp.log(s)                            # = softplus(-|x|), stable

    # log(sigmoid(x)) = min(x,0) - log_s ; log(1-sigmoid(x)) = -max(x,0) - log_s
    log_pt = jnp.clip(jnp.minimum(x, 0.0) - log_s, _LOG_PT_LO, _LOG_PT_HI)
    log_1m = jnp.clip(-jnp.maximum(x, 0.0) - log_s, _LOG_1M_LO, _LOG_1M_HI)

    # sigmoid via approx reciprocal + one Newton-Raphson step (VPU refinement).
    r = pl.reciprocal(s, approx=True)
    r = r * (2.0 - s * r)
    pt = jnp.where(x >= 0.0, r, 1.0 - r)
    pt = jnp.clip(pt, float(_PT_LO), float(_PT_HI))
    one_m_pt = 1.0 - pt

    # --- powers: cheap integer_pow for int gamma, reuse logs otherwise ------
    is_int_gamma = (isinstance(gamma, (int, np.integer)) or
                    (isinstance(gamma, float) and float(gamma).is_integer()))
    if is_int_gamma:
        g = int(gamma)
        w_pos = one_m_pt ** g
        w_neg = pt ** g
    else:
        w_pos = jnp.exp(gamma * log_1m)           # (1-pt)^gamma
        w_neg = jnp.exp(gamma * log_pt)           # pt^gamma

    loss = (-alpha) * w_pos * t * log_pt - (1.0 - alpha) * w_neg * (1.0 - t) * log_1m

    # Reduce (tile_r, lanes) -> (8, lanes) with pure vreg-wise adds (VPU only).
    def _store(l):
        out_ref[...] = l.reshape(tile_r // 8, 8, lanes).sum(axis=0)

    if needs_mask:
        # Garbage / out-of-range elements only ever live in the LAST tile;
        # gate the mask there so every other tile pays nothing.
        last = pl.num_programs(0) - 1

        @pl.when(i != last)
        def _():
            _store(loss)

        @pl.when(i == last)
        def _():
            rows_i = jax.lax.broadcasted_iota(jnp.int32, (tile_r, lanes), 0)
            cols_i = jax.lax.broadcasted_iota(jnp.int32, (tile_r, lanes), 1)
            valid = total_elems - i * (tile_r * lanes)       # scalar
            mask = (rows_i * lanes + cols_i) < valid
            _store(jnp.where(mask, loss, 0.0))
    else:
        _store(loss)


def focal_loss(logits, targets, gamma=2, alpha=0.5, reduction="mean",
               *, target_tile_bytes=2 * 1024 * 1024):
    """FocalLoss forward. logits/targets: same shape, any rank/dtype."""
    assert logits.shape == targets.shape
    x = jnp.ravel(logits)
    t = jnp.ravel(targets)
    total = int(x.shape[0])
    assert total > 0

    # Pick a lane width that divides total -> reshape is free (no HBM copy).
    lanes = next((c for c in (512, 256, 128) if total % c == 0), None)
    if lanes is None:
        # Rare ragged case (total not a multiple of 128): minimal pad to one
        # lane row.  The padded tail is masked off in-kernel.
        # TODO(synk): replace this pad copy with a tiny separate tail pass.
        lanes = 128
        pad = (-total) % lanes
        x = jnp.pad(x, (0, pad))
        t = jnp.pad(t, (0, pad))
    rows = x.shape[0] // lanes
    x2 = x.reshape(rows, lanes)
    t2 = t.reshape(rows, lanes)

    # ~2 MiB f32 per input tile; tile_r always a multiple of 8 (partial last
    # block is allowed and masked).
    tile_elems = max(lanes * 8, target_tile_bytes // 4)
    tile_r_cap = max(8, (tile_elems // lanes) // 8 * 8)
    rows8 = ((rows + 7) // 8) * 8
    tile_r = min(tile_r_cap, rows8)
    num_tiles = -(-rows // tile_r)
    needs_mask = (num_tiles * tile_r * lanes) != total

    kernel = functools.partial(
        _focal_loss_kernel, gamma=gamma, alpha=alpha,
        tile_r=tile_r, lanes=lanes, total_elems=total, needs_mask=needs_mask)

    covered = num_tiles * tile_r * lanes
    cost = pl.CostEstimate(
        flops=24 * covered,
        transcendentals=3 * covered,              # exp + log + vrcp per element
        bytes_accessed=(x2.size * x2.dtype.itemsize
                        + t2.size * t2.dtype.itemsize
                        + num_tiles * 8 * lanes * 4),
    )

    partials = pl.pallas_call(
        kernel,
        out_shape=jax.ShapeDtypeStruct((num_tiles * 8, lanes), jnp.float32),
        grid=(num_tiles,),
        in_specs=[
            pl.BlockSpec((tile_r, lanes), lambda i: (i, 0)),
            pl.BlockSpec((tile_r, lanes), lambda i: (i, 0)),
        ],
        out_specs=pl.BlockSpec((8, lanes), lambda i: (i, 0)),
        compiler_params=pltpu.CompilerParams(
            dimension_semantics=("parallel",),      # v7x: shard tiles over 2 TCs
            vmem_limit_bytes=32 * 1024 * 1024,      # safe on v5e/v6e/v7x
        ),
        cost_estimate=cost,
    )(x2, t2)

    total_loss = jnp.sum(partials)
    if reduction == "mean":
        # 1/total computed in Python double, then a single multiply.
        return total_loss * (1.0 / total)
    elif reduction == "sum":
        return total_loss
    else:
        # TODO(synk): reduction='none' (full elementwise loss output) not implemented.
        raise NotImplementedError("reduction='none' not supported by this kernel")


if __name__ == "__main__":
    key = jax.random.PRNGKey(0)
    k1, k2 = jax.random.split(key)

    N, C, H, W = 2, 4, 16, 16
    logits = jax.random.normal(k1, (N, C, H, W), dtype=jnp.float32)
    targets = (jax.random.uniform(k2, (N, C, H, W)) > 0.5).astype(jnp.float32)

    loss = focal_loss(logits, targets, gamma=2, alpha=0.5, reduction="mean")
    jax.block_until_ready(loss)

    # pure-JAX reference of the PyTorch FocalLoss forward
    gamma, alpha = 2, 0.5
    pt = jnp.clip(jax.nn.sigmoid(logits), 1e-4, 0.9999)
    ref = jnp.mean(-alpha * (1.0 - pt) ** gamma * targets * jnp.log(pt)
                   - (1.0 - alpha) * pt ** gamma * (1.0 - targets) * jnp.log(1.0 - pt))
    assert jnp.allclose(loss, ref, atol=1e-5, rtol=1e-4), (loss, ref)

    print("KERNEL_OK")
</pallas_src>

<mosaic_0001>
module attributes {stable_mosaic.version = 11 : i64} {
  func.func @_focal_loss_kernel(%arg0: i32, %arg1: memref<8x512xf32, #tpu.memory_space<vmem>>, %arg2: memref<8x512xf32, #tpu.memory_space<vmem>>, %arg3: memref<8x512xf32, #tpu.memory_space<vmem>>) attributes {dimension_semantics = [#tpu.dimension_semantics<parallel>], iteration_bounds = array<i64: 1>, scalar_prefetch = 0 : i64, scratch_operands = 0 : i64, tpu.core_type = #tpu.core_type<tc>, window_params = [{transform_indices = @transform_0, window_bounds = array<i64: 8, 512>}, {transform_indices = @transform_1, window_bounds = array<i64: 8, 512>}, {transform_indices = @transform_2, window_bounds = array<i64: 8, 512>}]} {
    %c0 = arith.constant 0 : index
    %c0_0 = arith.constant 0 : index
    %0 = vector.load %arg1[%c0, %c0_0] : memref<8x512xf32, #tpu.memory_space<vmem>>, vector<8x512xf32>
    %c0_1 = arith.constant 0 : index
    %c0_2 = arith.constant 0 : index
    %1 = vector.load %arg2[%c0_1, %c0_2] : memref<8x512xf32, #tpu.memory_space<vmem>>, vector<8x512xf32>
    %2 = math.absf %0 : vector<8x512xf32>
    %cst = arith.constant 0.000000e+00 : f32
    %3 = vector.broadcast %cst : f32 to vector<8x512xf32>
    %4 = arith.subf %3, %2 : vector<8x512xf32>
    %5 = math.exp %4 : vector<8x512xf32>
    %cst_3 = arith.constant 1.000000e+00 : f32
    %6 = vector.broadcast %cst_3 : f32 to vector<8x512xf32>
    %7 = arith.addf %6, %5 : vector<8x512xf32>
    %8 = math.log %7 : vector<8x512xf32>
    %cst_4 = arith.constant 0.000000e+00 : f32
    %9 = vector.broadcast %cst_4 : f32 to vector<8x512xf32>
    %10 = arith.minimumf %0, %9 : vector<8x512xf32>
    %11 = arith.subf %10, %8 : vector<8x512xf32>
    %cst_5 = arith.constant -9.21034049 : f32
    %cst_6 = arith.constant -1.00021593E-4 : f32
    %12 = vector.broadcast %cst_5 : f32 to vector<8x512xf32>
    %13 = arith.maximumf %12, %11 : vector<8x512xf32>
    %14 = vector.broadcast %cst_6 : f32 to vector<8x512xf32>
    %15 = arith.minimumf %14, %13 : vector<8x512xf32>
    %cst_7 = arith.constant 0.000000e+00 : f32
    %16 = vector.broadcast %cst_7 : f32 to vector<8x512xf32>
    %17 = arith.maximumf %0, %16 : vector<8x512xf32>
    %cst_8 = arith.constant 0.000000e+00 : f32
    %18 = vector.broadcast %cst_8 : f32 to vector<8x512xf32>
    %19 = arith.subf %18, %17 : vector<8x512xf32>
    %20 = arith.subf %19, %8 : vector<8x512xf32>
    %cst_9 = arith.constant -9.21017456 : f32
    %cst_10 = arith.constant -1.00021593E-4 : f32
    %21 = vector.broadcast %cst_9 : f32 to vector<8x512xf32>
    %22 = arith.maximumf %21, %20 : vector<8x512xf32>
    %23 = vector.broadcast %cst_10 : f32 to vector<8x512xf32>
    %24 = arith.minimumf %23, %22 : vector<8x512xf32>
    %25 = tpu.reciprocal %7 {approx = true} : vector<8x512xf32> -> vector<8x512xf32>
    %26 = arith.mulf %7, %25 : vector<8x512xf32>
    %cst_11 = arith.constant 2.000000e+00 : f32
    %27 = vector.broadcast %cst_11 : f32 to vector<8x512xf32>
    %28 = arith.subf %27, %26 : vector<8x512xf32>
    %29 = arith.mulf %25, %28 : vector<8x512xf32>
    %cst_12 = arith.constant 0.000000e+00 : f32
    %30 = vector.broadcast %cst_12 : f32 to vector<8x512xf32>
    %31 = arith.cmpf oge, %0, %30 : vector<8x512xf32>
    %cst_13 = arith.constant 1.000000e+00 : f32
    %32 = vector.broadcast %cst_13 : f32 to vector<8x512xf32>
    %33 = arith.subf %32, %29 : vector<8x512xf32>
    %34 = arith.select %31, %29, %33 : vector<8x512xi1>, vector<8x512xf32>
    %cst_14 = arith.constant 9.99999974E-5 : f32
    %cst_15 = arith.constant 0.999899983 : f32
    %35 = vector.broadcast %cst_14 : f32 to vector<8x512xf32>
    %36 = arith.maximumf %35, %34 : vector<8x512xf32>
    %37 = vector.broadcast %cst_15 : f32 to vector<8x512xf32>
    %38 = arith.minimumf %37, %36 : vector<8x512xf32>
    %cst_16 = arith.constant 1.000000e+00 : f32
    %39 = vector.broadcast %cst_16 : f32 to vector<8x512xf32>
    %40 = arith.subf %39, %38 : vector<8x512xf32>
    %41 = arith.mulf %40, %40 : vector<8x512xf32>
    %42 = arith.mulf %38, %38 : vector<8x512xf32>
    %cst_17 = arith.constant -5.000000e-01 : f32
    %43 = vector.broadcast %cst_17 : f32 to vector<8x512xf32>
    %44 = arith.mulf %43, %41 : vector<8x512xf32>
    %45 = arith.mulf %44, %1 : vector<8x512xf32>
    %46 = arith.mulf %45, %15 : vector<8x512xf32>
    %cst_18 = arith.constant 5.000000e-01 : f32
    %47 = vector.broadcast %cst_18 : f32 to vector<8x512xf32>
    %48 = arith.mulf %47, %42 : vector<8x512xf32>
    %cst_19 = arith.constant 1.000000e+00 : f32
    %49 = vector.broadcast %cst_19 : f32 to vector<8x512xf32>
    %50 = arith.subf %49, %1 : vector<8x512xf32>
    %51 = arith.mulf %48, %50 : vector<8x512xf32>
    %52 = arith.mulf %51, %24 : vector<8x512xf32>
    %53 = arith.subf %46, %52 : vector<8x512xf32>
    %c0_i32 = arith.constant 0 : i32
    %54 = arith.cmpi ne, %arg0, %c0_i32 : i32
    %55 = arith.extui %54 : i1 to i32
    %c0_i32_20 = arith.constant 0 : i32
    %56 = arith.cmpi ne, %55, %c0_i32_20 : i32
    scf.if %56 {
      %60 = vector.shape_cast %53 : vector<8x512xf32> to vector<1x8x512xf32>
      %cst_23 = arith.constant dense<0.000000e+00> : vector<8x512xf32>
      %61 = vector.multi_reduction <add>, %60, %cst_23 [0] : vector<1x8x512xf32> to vector<8x512xf32>
      %c0_24 = arith.constant 0 : index
      %c0_25 = arith.constant 0 : index
      %62 = vector.load %arg3[%c0_24, %c0_25] : memref<8x512xf32, #tpu.memory_space<vmem>>, vector<8x512xf32>
      tpu.vector_store %arg3[%c0_24, %c0_25], %61 {strides = array<i32>} : memref<8x512xf32, #tpu.memory_space<vmem>>, vector<8x512xf32>,
    } else {
    }
    %c0_i32_21 = arith.constant 0 : i32
    %57 = arith.cmpi eq, %arg0, %c0_i32_21 : i32
    %58 = arith.extui %57 : i1 to i32
    %c0_i32_22 = arith.constant 0 : i32
    %59 = arith.cmpi ne, %58, %c0_i32_22 : i32
    scf.if %59 {
      %60 = tpu.iota {dimensions = array<i32: 0>} : vector<8x512xi32>
      %61 = tpu.iota {dimensions = array<i32: 1>} : vector<8x512xi32>
      %c4096_i32 = arith.constant 4096 : i32
      %62 = arith.muli %arg0, %c4096_i32 : i32
      %c2048_i32 = arith.constant 2048 : i32
      %63 = arith.subi %c2048_i32, %62 : i32
      %c512_i32 = arith.constant 512 : i32
      %64 = vector.broadcast %c512_i32 : i32 to vector<8x512xi32>
      %65 = arith.muli %60, %64 : vector<8x512xi32>
      %66 = arith.addi %65, %61 : vector<8x512xi32>
      %67 = vector.broadcast %63 : i32 to vector<8x512xi32>
      %68 = arith.cmpi slt, %66, %67 : vector<8x512xi32>
      %cst_23 = arith.constant 0.000000e+00 : f32
      %69 = vector.broadcast %cst_23 : f32 to vector<8x512xf32>
      %70 = arith.select %68, %53, %69 : vector<8x512xi1>, vector<8x512xf32>
      %71 = vector.shape_cast %70 : vector<8x512xf32> to vector<1x8x512xf32>
      %cst_24 = arith.constant dense<0.000000e+00> : vector<8x512xf32>
      %72 = vector.multi_reduction <add>, %71, %cst_24 [0] : vector<1x8x512xf32> to vector<8x512xf32>
      %c0_25 = arith.constant 0 : index
      %c0_26 = arith.constant 0 : index
      %73 = vector.load %arg3[%c0_25, %c0_26] : memref<8x512xf32, #tpu.memory_space<vmem>>, vector<8x512xf32>
      tpu.vector_store %arg3[%c0_25, %c0_26], %72 {strides = array<i32>} : memref<8x512xf32, #tpu.memory_space<vmem>>, vector<8x512xf32>,
    } else {
    }
    return
  }
  func.func @transform_0(%arg0: i32) -> (i32, i32) {
    %c0_i32 = arith.constant 0 : i32
    %c0_i32_0 = arith.constant 0 : i32
    return %arg0, %c0_i32 : i32, i32
  }
  func.func @transform_1(%arg0: i32) -> (i32, i32) {
    %c0_i32 = arith.constant 0 : i32
    %c0_i32_0 = arith.constant 0 : i32
    return %arg0, %c0_i32 : i32, i32
  }
  func.func @transform_2(%arg0: i32) -> (i32, i32) {
    %c0_i32 = arith.constant 0 : i32
    %c0_i32_0 = arith.constant 0 : i32
    return %arg0, %c0_i32 : i32, i32
  }
}

</mosaic_0001>

<llo_original>
// kernel: tpu_custom_call.1
$region0: #{tpu_custom_call.1}
  #allocation0 [shape = 'u32[]', space=smem, size = 0x4, offset = 0x4, fixed_abs, tag = 'smem constant byte address 0x4 - core index']
  #allocation1 [shape = 'u32[144,128]{1,0:T(1,128)}', space=vmem, size = 0x12000, scoped, tag = 'internal scratch']
  %s0 = inlined_call_operand.hbm [shape: f32[4,512], index: 0, kind: input, shape index: {}]
  %s1 = inlined_call_operand.hbm [shape: f32[4,512], index: 1, kind: input, shape index: {}]
  %s2 = inlined_call_operand.hbm [shape: f32[8,512], index: 2, kind: output, shape index: {}]
  %s3 = sld [smem:[#allocation0]]
  $region34: #{tpu_custom_call.1} parent=0
    _
  %s5 = ssub.s32 1, %s3
  %s6 = scalar_select 0, %s5, %s3
  $region1: #{tpu_custom_call.1} parent=0
    #allocation2 [shape = 'u8[16384]{0}', space=vmem, size = 0x4000, scoped, tag = 'input window, operand 0, single buffered']
    #allocation3 [shape = 's32[1]{0}', space=sflag, size = 0x4, scoped, tag = 'scoped memory for tpu_custom_call.1']
    #allocation4 [shape = 's32[1]{0}', space=sflag, size = 0x4, scoped, tag = 'scoped memory for tpu_custom_call.1']
    #allocation5 [shape = 'u8[16384]{0}', space=vmem, size = 0x4000, scoped, tag = 'input window, operand 1, single buffered']
    #allocation6 [shape = 's32[1]{0}', space=sflag, size = 0x4, scoped, tag = 'scoped memory for tpu_custom_call.1']
    #allocation7 [shape = 'u8[16384]{0}', space=vmem, size = 0x4000, scoped, tag = 'output window, operand 0, single buffered']
    %7 = vsyncpa [#allocation3], 0
    %8 = vsyncpa [#allocation6], 0
    %9 = vsyncpa [#allocation4], 0
    // Predicated region
    $region2: #{tpu_custom_call.1} parent=1 // pred_check
      _
    $region3: #{tpu_custom_call.1} parent=1 // pred_check_branch
      %11 = sbr.rel (0) target = $region5
    $region4: #{tpu_custom_call.1} parent=1 // pred_region
      %s13 = ssub.s32 512, 256
      %14 = vsyncadd [#allocation3], %s13
      %s15 = sshll.u32 [#allocation2], 4
      %s16 = int_to_ptr.vmem [resolvable:$true] %s15
      %21 = dma.hbm_to_vmem [thread:$0]  %s0, 256, %s16, [#allocation3], 256, 256, 16
    $region5: #{tpu_custom_call.1} parent=1 // pred_fallthru
      _
    // Predicated region
    $region6: #{tpu_custom_call.1} parent=1 // pred_check
      _
    $region7: #{tpu_custom_call.1} parent=1 // pred_check_branch
      %23 = sbr.rel (0) target = $region9
    $region8: #{tpu_custom_call.1} parent=1 // pred_region
      %s25 = ssub.s32 512, 256
      %26 = vsyncadd [#allocation6], %s25
      %s27 = sshll.u32 [#allocation5], 4
      %s28 = int_to_ptr.vmem [resolvable:$true] %s27
      %33 = dma.hbm_to_vmem [thread:$0]  %s1, 256, %s28, [#allocation6], 256, 256, 16
    $region9: #{tpu_custom_call.1} parent=1 // pred_fallthru
      _
    // Predicated region
    $region10: #{tpu_custom_call.1} parent=1 // pred_check
      _
    $region11: #{tpu_custom_call.1} parent=1 // pred_check_branch
      %35 = sbr.rel (0) target = $region13
    $region12: #{tpu_custom_call.1} parent=1 // pred_region
      %36 = dma.done [#allocation3], 512
    $region13: #{tpu_custom_call.1} parent=1 // pred_fallthru
      _
    // Predicated region
    $region14: #{tpu_custom_call.1} parent=1 // pred_check
      _
    $region15: #{tpu_custom_call.1} parent=1 // pred_check_branch
      %38 = sbr.rel (0) target = $region17
    $region16: #{tpu_custom_call.1} parent=1 // pred_region
      %39 = dma.done [#allocation6], 512
    $region17: #{tpu_custom_call.1} parent=1 // pred_fallthru
      _
    %v40 = vld [vmem:[#allocation2] sm:$0xff]
    %v41 = vld [vmem:[#allocation2 + $0x8] sm:$0xff]
    %v42 = vld [vmem:[#allocation2 + $0x10] sm:$0xff]
    %v43 = vld [vmem:[#allocation2 + $0x18] sm:$0xff]
    %v44 = vld [vmem:[#allocation5] sm:$0xff]
    %v45 = vld [vmem:[#allocation5 + $0x8] sm:$0xff]
    %v46 = vld [vmem:[#allocation5 + $0x10] sm:$0xff]
    %v47 = vld [vmem:[#allocation5 + $0x18] sm:$0xff]
    %v48 = vand.u32 2147483647, %v40
    %v49 = vand.u32 2147483647, %v41
    %v50 = vand.u32 2147483647, %v42
    %v51 = vand.u32 2147483647, %v43
    %v52 = vsub.f32 0.0, %v48
    %v53 = vsub.f32 0.0, %v49
    %v54 = vsub.f32 0.0, %v50
    %v55 = vsub.f32 0.0, %v51
    %v56 = vmul.f32 %v52, 1.442695
    %v57 = vpow.pop %v56
    %v58 = vmul.f32 %v53, 1.442695
    %v59 = vpow.pop %v58
    %v60 = vmul.f32 %v54, 1.442695
    %v61 = vpow.pop %v60
    %v62 = vmul.f32 %v55, 1.442695
    %v63 = vpow.pop %v62
    %v64 = vadd.f32 %v57, 1.0
    %v65 = vadd.f32 %v59, 1.0
    %v66 = vadd.f32 %v61, 1.0
    %v67 = vadd.f32 %v63, 1.0
    %v68 = vlog2.pop %v64
    %v69 = vmul.f32 %v68, 0.6931472
    %v70 = vlog2.pop %v65
    %v71 = vmul.f32 %v70, 0.6931472
    %v72 = vlog2.pop %v66
    %v73 = vmul.f32 %v72, 0.6931472
    %v74 = vlog2.pop %v67
    %v75 = vmul.f32 %v74, 0.6931472
    %v76 = vmin.f32 %v40, 0.0
    %v77 = vmin.f32 %v41, 0.0
    %v78 = vmin.f32 %v42, 0.0
    %v79 = vmin.f32 %v43, 0.0
    %v80 = vsub.f32 %v76, %v69
    %v81 = vsub.f32 %v77, %v71
    %v82 = vsub.f32 %v78, %v73
    %v83 = vsub.f32 %v79, %v75
    %v84 = vmax.f32 %v80, -9.2103405
    %v85 = vmax.f32 %v81, -9.2103405
    %v86 = vmax.f32 %v82, -9.2103405
    %v87 = vmax.f32 %v83, -9.2103405
    %v88 = vmin.f32 %v84, -0.00010002159
    %v89 = vmin.f32 %v85, -0.00010002159
    %v90 = vmin.f32 %v86, -0.00010002159
    %v91 = vmin.f32 %v87, -0.00010002159
    %v92 = vmax.f32 %v40, 0.0
    %v93 = vmax.f32 %v41, 0.0
    %v94 = vmax.f32 %v42, 0.0
    %v95 = vmax.f32 %v43, 0.0
    %v96 = vsub.f32 0.0, %v92
    %v97 = vsub.f32 0.0, %v93
    %v98 = vsub.f32 0.0, %v94
    %v99 = vsub.f32 0.0, %v95
    %v100 = vsub.f32 %v96, %v69
    %v101 = vsub.f32 %v97, %v71
    %v102 = vsub.f32 %v98, %v73
    %v103 = vsub.f32 %v99, %v75
    %v104 = vmax.f32 %v100, -9.210175
    %v105 = vmax.f32 %v101, -9.210175
    %v106 = vmax.f32 %v102, -9.210175
    %v107 = vmax.f32 %v103, -9.210175
    %v108 = vmin.f32 %v104, -0.00010002159
    %v109 = vmin.f32 %v105, -0.00010002159
    %v110 = vmin.f32 %v106, -0.00010002159
    %v111 = vmin.f32 %v107, -0.00010002159
    %v112 = vrcp.pop %v64
    %v113 = vrcp.pop %v65
    %v114 = vrcp.pop %v66
    %v115 = vrcp.pop %v67
    %v116 = vmul.f32 %v64, %v112
    %v117 = vmul.f32 %v65, %v113
    %v118 = vmul.f32 %v66, %v114
    %v119 = vmul.f32 %v67, %v115
    %v120 = vsub.f32 2.0, %v116
    %v121 = vsub.f32 2.0, %v117
    %v122 = vsub.f32 2.0, %v118
    %v123 = vsub.f32 2.0, %v119
    %v124 = vmul.f32 %v112, %v120
    %v125 = vmul.f32 %v113, %v121
    %v126 = vmul.f32 %v114, %v122
    %v127 = vmul.f32 %v115, %v123
    %vm128 = vcmp.ge.f32.partialorder %v40, 0.0
    %vm129 = vcmp.ge.f32.partialorder %v41, 0.0
    %vm130 = vcmp.ge.f32.partialorder %v42, 0.0
    %vm131 = vcmp.ge.f32.partialorder %v43, 0.0
    %v132 = vsub.f32 1.0, %v124
    %v133 = vsub.f32 1.0, %v125
    %v134 = vsub.f32 1.0, %v126
    %v135 = vsub.f32 1.0, %v127
    %v136 = vsel %vm128, %v124, %v132
    %v137 = vsel %vm129, %v125, %v133
    %v138 = vsel %vm130, %v126, %v134
    %v139 = vsel %vm131, %v127, %v135
    %v140 = vmax.f32 %v136, 0.0001
    %v141 = vmax.f32 %v137, 0.0001
    %v142 = vmax.f32 %v138, 0.0001
    %v143 = vmax.f32 %v139, 0.0001
    %v144 = vmin.f32 %v140, 0.9999
    %v145 = vmin.f32 %v141, 0.9999
    %v146 = vmin.f32 %v142, 0.9999
    %v147 = vmin.f32 %v143, 0.9999
    %v148 = vsub.f32 1.0, %v144
    %v149 = vsub.f32 1.0, %v145
    %v150 = vsub.f32 1.0, %v146
    %v151 = vsub.f32 1.0, %v147
    %v152 = vmul.f32 %v148, %v148
    %v153 = vmul.f32 %v149, %v149
    %v154 = vmul.f32 %v150, %v150
    %v155 = vmul.f32 %v151, %v151
    %v156 = vmul.f32 %v144, %v144
    %v157 = vmul.f32 %v145, %v145
    %v158 = vmul.f32 %v146, %v146
    %v159 = vmul.f32 %v147, %v147
    %v160 = vmul.f32 %v152, -0.5
    %v161 = vmul.f32 %v153, -0.5
    %v162 = vmul.f32 %v154, -0.5
    %v163 = vmul.f32 %v155, -0.5
    %v164 = vmul.f32 %v160, %v44
    %v165 = vmul.f32 %v161, %v45
    %v166 = vmul.f32 %v162, %v46
    %v167 = vmul.f32 %v163, %v47
    %v168 = vmul.f32 %v164, %v88
    %v169 = vmul.f32 %v165, %v89
    %v170 = vmul.f32 %v166, %v90
    %v171 = vmul.f32 %v167, %v91
    %v172 = vmul.f32 %v156, 0.5
    %v173 = vmul.f32 %v157, 0.5
    %v174 = vmul.f32 %v158, 0.5
    %v175 = vmul.f32 %v159, 0.5
    %v176 = vsub.f32 1.0, %v44
    %v177 = vsub.f32 1.0, %v45
    %v178 = vsub.f32 1.0, %v46
    %v179 = vsub.f32 1.0, %v47
    %v180 = vmul.f32 %v172, %v176
    %v181 = vmul.f32 %v173, %v177
    %v182 = vmul.f32 %v174, %v178
    %v183 = vmul.f32 %v175, %v179
    %v184 = vmul.f32 %v180, %v108
    %v185 = vmul.f32 %v181, %v109
    %v186 = vmul.f32 %v182, %v110
    %v187 = vmul.f32 %v183, %v111
    %v188 = vsub.f32 %v168, %v184
    %v189 = vsub.f32 %v169, %v185
    %v190 = vsub.f32 %v170, %v186
    %v191 = vsub.f32 %v171, %v187
    %p192 = scmp.ne.s32.totalorder 0, 0
    // Predicated region
    $region18: #{tpu_custom_call.1} parent=1 // pred_check
      %p193 = pneg %p192
    $region19: #{tpu_custom_call.1} parent=1 // pred_check_branch
      %195 = sbr.rel (%p193) target = $region21
    $region20: #{tpu_custom_call.1} parent=1 // pred_region
      %v196 = vadd.f32 %v188, 0.0
      %v197 = vadd.f32 %v189, 0.0
      %v198 = vadd.f32 %v190, 0.0
      %v199 = vadd.f32 %v191, 0.0
      %v204 = vcombine.low %v196, %v198
      %v205 = vcombine.high %v196, %v198
      %v206 = vcombine.low %v197, %v199
      %v207 = vcombine.high %v197, %v199
      %212 = vst [vmem:[#allocation7] sm:$0xff] %v204
      %213 = vst [vmem:[#allocation7 + $0x8] sm:$0xff] %v205
      %214 = vst [vmem:[#allocation7 + $0x10] sm:$0xff] %v206
      %215 = vst [vmem:[#allocation7 + $0x18] sm:$0xff] %v207
    $region21: #{tpu_custom_call.1} parent=1 // pred_fallthru
      _
    %p216 = scmp.eq.s32.totalorder 0, 0
    // Predicated region
    $region22: #{tpu_custom_call.1} parent=1 // pred_check
      %p217 = pneg %p216
    $region23: #{tpu_custom_call.1} parent=1 // pred_check_branch
      %219 = sbr.rel (%p217) target = $region25
    $region24: #{tpu_custom_call.1} parent=1 // pred_region
      %v220 = vlaneseq
      %v221 = vshrl.u32 %v220, 7
      %v222 = vlaneseq
      %v223 = vand.u32 %v222, 127
      %v224 = vadd.s32 %v223, 128
      %v225 = vadd.s32 %v223, 256
      %v226 = vadd.s32 %v223, 384
      %s227 = smul.u32 0, 4096
      %s228 = ssub.s32 2048, %s227
      %v229 = vmul.u32 %v221, 512
      %v230 = vadd.s32 %v229, %v223
      %v231 = vadd.s32 %v229, %v224
      %v232 = vadd.s32 %v229, %v225
      %v233 = vadd.s32 %v229, %v226
      %v234 = vstv %s228
      %vm235 = vcmp.lt.s32.totalorder %v230, %v234
      %vm236 = vcmp.lt.s32.totalorder %v231, %v234
      %vm237 = vcmp.lt.s32.totalorder %v232, %v234
      %vm238 = vcmp.lt.s32.totalorder %v233, %v234
      %v243 = vcombine.low %v188, %v190
      %v244 = vcombine.high %v188, %v190
      %v245 = vcombine.low %v189, %v191
      %v246 = vcombine.high %v189, %v191
      %v251 = vsel %vm235, %v243, 0.0
      %v252 = vsel %vm236, %v244, 0.0
      %v253 = vsel %vm237, %v245, 0.0
      %v254 = vsel %vm238, %v246, 0.0
      %v255 = vadd.f32 %v251, 0.0
      %v256 = vadd.f32 %v252, 0.0
      %v257 = vadd.f32 %v253, 0.0
      %v258 = vadd.f32 %v254, 0.0
      %259 = vst [vmem:[#allocation7] sm:$0xff] %v255
      %260 = vst [vmem:[#allocation7 + $0x8] sm:$0xff] %v256
      %261 = vst [vmem:[#allocation7 + $0x10] sm:$0xff] %v257
      %262 = vst [vmem:[#allocation7 + $0x18] sm:$0xff] %v258
    $region25: #{tpu_custom_call.1} parent=1 // pred_fallthru
      _
    // Predicated region
    $region26: #{tpu_custom_call.1} parent=1 // pred_check
      _
    $region27: #{tpu_custom_call.1} parent=1 // pred_check_branch
      %264 = sbr.rel (0) target = $region29
    $region28: #{tpu_custom_call.1} parent=1 // pred_region
      %s266 = ssub.s32 512, 512
      %267 = vsyncadd [#allocation4], %s266
      %s269 = sshll.u32 [#allocation7], 4
      %s270 = int_to_ptr.vmem [resolvable:$true] %s269
      %272 = dma.vmem_to_hbm [thread:$0]  %s270, 512, %s2, [#allocation4]
    $region29: #{tpu_custom_call.1} parent=1 // pred_fallthru
      _
    // Predicated region
    $region30: #{tpu_custom_call.1} parent=1 // pred_check
      _
    $region31: #{tpu_custom_call.1} parent=1 // pred_check_branch
      %274 = sbr.rel (0) target = $region33
    $region32: #{tpu_custom_call.1} parent=1 // pred_region
      %275 = dma.done [#allocation4], 512
    $region33: #{tpu_custom_call.1} parent=1 // pred_fallthru
      _
    %276 = vsyncpa [#allocation3], 1
    %277 = vsyncpa [#allocation6], 1
    %278 = vsyncpa [#allocation4], 1

</llo_original>
